<compile_context>
chip_gen: v5e
topology: v5e:2x2
jax: 0.10.0
libtpu: 0.0.40
codegen_flags: <defaults>
</compile_context>

<pallas_src>
import jax
import jax.numpy as jnp
import numpy as np
from jax.experimental import pallas as pl
from jax.experimental.pallas import tpu as pltpu

_BN_EPS = 1e-5


def _build_band_banks(w_oihw, W):
    """Fold OIHW 3x3 conv weights into 3 banded matrices of shape (Cin*W, W*Cout).

    Bank ky maps the channel-striped input row (K lane = ci*W + w_in) to the lane-dense
    output row (lane = w_out*Cout + co).  padding=1 along W is folded into the band
    structure: taps that would read the zero pad are simply omitted, so the kernel needs
    no horizontal zero-padding of the input.
    """
    Cout, Cin, KH, KW = w_oihw.shape
    co, ci, ky, kx, w = np.meshgrid(
        np.arange(Cout), np.arange(Cin), np.arange(KH), np.arange(KW),
        np.arange(W), indexing="ij")
    wi = w + kx - 1                              # input column hit by output col w, tap kx
    valid = (wi >= 0) & (wi < W)                 # out-of-range taps hit the zero pad -> drop
    co_v, ci_v, ky_v, kx_v, w_v, wi_v = (a[valid] for a in (co, ci, ky, kx, w, wi))
    rows = ci_v * W + wi_v                       # matmul K axis
    cols = w_v * Cout + co_v                     # lane-dense output axis
    vals = w_oihw[co_v, ci_v, ky_v, kx_v].astype(jnp.float32)
    banks = jnp.zeros((KH, Cin * W, W * Cout), dtype=jnp.float32)
    return banks.at[ky_v, rows, cols].set(vals)


def _encoder_out_kernel(x_ref, banks_ref, bias_ref, gamma_ref, beta_ref, o_ref, xs_ref):
    # x_ref:     (N, Cin, H, W)        whole batch, native NCHW layout
    # banks_ref: (3, Cin*W, W*Cout)    per-tap-row banded conv weights
    # bias_ref / gamma_ref / beta_ref: (1, Cout)
    # o_ref:     (N*H, W*Cout)         fused conv+BN+ReLU result, lane-dense
    # xs_ref:    VMEM (N, H+2, Cin*W)  channel-striped input with 1-row vertical halo
    N, Cin, H, W = x_ref.shape
    K = Cin * W
    WC = o_ref.shape[-1]
    Cout = WC // W
    f32 = jnp.float32

    # ---- striped input assembly: channel ci -> lanes [ci*W, (ci+1)*W) ---------------
    # Only the 2 halo rows per image are zeroed (no full-scratch memset); data rows are
    # fully covered by the per-channel stores.
    zrow = jnp.zeros((1, K), f32)
    for n in range(N):
        xs_ref[n, 0:1, :] = zrow                       # top halo row
        xs_ref[n, H + 1:H + 2, :] = zrow               # bottom halo row
        for ci in range(Cin):
            xs_ref[n, 1:H + 1, ci * W:(ci + 1) * W] = x_ref[n, ci].astype(f32)

    # ---- conv: 3 accumulating MXU dots, M = N*H (all images blocked together) -------
    def lhs(dy):  # (N*H, K) slab of input rows shifted by tap-row dy
        return jnp.concatenate([xs_ref[n, dy:dy + H, :] for n in range(N)], axis=0)

    acc = jnp.dot(lhs(1), banks_ref[1], preferred_element_type=f32)
    acc = acc + jnp.dot(lhs(0), banks_ref[0], preferred_element_type=f32)
    acc = acc + jnp.dot(lhs(2), banks_ref[2], preferred_element_type=f32)

    # ---- 0/1 gather (lanes -> channels) and scatter (channels -> lanes) matrices ----
    # Lane l of the output layout holds channel (l % Cout).
    G = (jax.lax.broadcasted_iota(jnp.int32, (WC, Cout), 0) % Cout
         == jax.lax.broadcasted_iota(jnp.int32, (WC, Cout), 1)).astype(f32)   # (WC, Cout)
    GT = (jax.lax.broadcasted_iota(jnp.int32, (Cout, WC), 1) % Cout
          == jax.lax.broadcasted_iota(jnp.int32, (Cout, WC), 0)).astype(f32)  # (Cout, WC)

    bias_row = jnp.dot(bias_ref[...].astype(f32), GT, preferred_element_type=f32)  # (1, WC)
    acc = acc + bias_row

    # ---- fused BatchNorm2d (training batch stats, centered variance) + ReLU ---------
    inv_cnt = 1.0 / float(N * H * W)
    s1 = jnp.sum(acc, axis=0, keepdims=True)                              # (1, WC)
    mean_c = jnp.dot(s1, G, preferred_element_type=f32) * inv_cnt         # (1, Cout)
    mean_row = jnp.dot(mean_c, GT, preferred_element_type=f32)            # (1, WC)
    cen = acc - mean_row
    s2 = jnp.sum(cen * cen, axis=0, keepdims=True)                        # centered -> no
    var_c = jnp.dot(s2, G, preferred_element_type=f32) * inv_cnt          # cancellation
    scale_c = gamma_ref[...].astype(f32) * jax.lax.rsqrt(var_c + _BN_EPS)
    scale_row = jnp.dot(scale_c, GT, preferred_element_type=f32)
    beta_row = jnp.dot(beta_ref[...].astype(f32), GT, preferred_element_type=f32)

    y = jnp.maximum(cen * scale_row + beta_row, 0.0)
    o_ref[...] = y.astype(o_ref.dtype)                                    # lane-dense store


def encoder_out_forward(x_nchw, w_oihw, bias, gamma, beta):
    """x: (N, Cin, H, W) -> (N, Cout, H, W), matching the PyTorch module (train-mode BN)."""
    N, Cin, H, W = x_nchw.shape
    Cout = w_oihw.shape[0]
    WC = W * Cout
    K = Cin * W

    banks = _build_band_banks(w_oihw, W)                     # (3, K, WC), one-time glue

    out2d = pl.pallas_call(
        _encoder_out_kernel,
        out_shape=jax.ShapeDtypeStruct((N * H, WC), x_nchw.dtype),
        grid_spec=pltpu.PrefetchScalarGridSpec(
            num_scalar_prefetch=0,
            grid=(1,),                                       # whole batch in one step
            in_specs=[
                pl.BlockSpec((N, Cin, H, W), lambda i: (0, 0, 0, 0)),
                pl.BlockSpec((3, K, WC), lambda i: (0, 0, 0)),
                pl.BlockSpec((1, Cout), lambda i: (0, 0)),
                pl.BlockSpec((1, Cout), lambda i: (0, 0)),
                pl.BlockSpec((1, Cout), lambda i: (0, 0)),
            ],
            out_specs=pl.BlockSpec((N * H, WC), lambda i: (0, 0)),
            scratch_shapes=[pltpu.VMEM((N, H + 2, K), jnp.float32)],
        ),
        compiler_params=pltpu.CompilerParams(
            dimension_semantics=("arbitrary",)),
    )(x_nchw, banks,
      bias.reshape(1, Cout).astype(jnp.float32),
      gamma.reshape(1, Cout).astype(jnp.float32),
      beta.reshape(1, Cout).astype(jnp.float32))

    # Interface glue back to the PyTorch NCHW convention (single tiny XLA permute).
    # TODO(synk): BatchNorm2d running_mean/running_var buffer updates (a training-time
    # side effect) are not modeled; the forward output does not depend on them.
    return out2d.reshape(N, H, W, Cout).transpose(0, 3, 1, 2)


def _reference(x_nchw, w_oihw, bias, gamma, beta):
    """Plain-JAX reference mirroring PyTorch Conv2d + BatchNorm2d(train) + ReLU."""
    y = jax.lax.conv_general_dilated(
        x_nchw, w_oihw, window_strides=(1, 1), padding=((1, 1), (1, 1)),
        dimension_numbers=("NCHW", "OIHW", "NCHW"))
    y = y + bias.reshape(1, -1, 1, 1)
    mean = jnp.mean(y, axis=(0, 2, 3), keepdims=True)
    var = jnp.mean((y - mean) ** 2, axis=(0, 2, 3), keepdims=True)
    y = (y - mean) / jnp.sqrt(var + _BN_EPS)
    y = y * gamma.reshape(1, -1, 1, 1) + beta.reshape(1, -1, 1, 1)
    return jnp.maximum(y, 0.0)


if __name__ == "__main__":
    # small shapes consistent with the module: batch=2, in_ch=4, out_ch=8, 16x16
    N, Cin, Cout, H, W = 2, 4, 8, 16, 16

    key = jax.random.PRNGKey(0)
    kx, kw, kb, kg, kbe = jax.random.split(key, 5)

    x = jax.random.normal(kx, (N, Cin, H, W), dtype=jnp.float32)
    w = jax.random.normal(kw, (Cout, Cin, 3, 3), dtype=jnp.float32) * 0.1
    b = jax.random.normal(kb, (Cout,), dtype=jnp.float32) * 0.1
    gamma = 1.0 + 0.1 * jax.random.normal(kg, (Cout,), dtype=jnp.float32)
    beta = 0.1 * jax.random.normal(kbe, (Cout,), dtype=jnp.float32)

    out = encoder_out_forward(x, w, b, gamma, beta)
    out = jax.block_until_ready(out)

    ref = _reference(x, w, b, gamma, beta)
    assert out.shape == (N, Cout, H, W)
    assert jnp.allclose(out, ref, atol=1e-4, rtol=1e-4), "mismatch vs reference"

    print("KERNEL_OK")
</pallas_src>

<mosaic_0001>
module attributes {stable_mosaic.version = 11 : i64} {
  func.func @_encoder_out_kernel(%arg0: i32, %arg1: memref<2x4x16x16xf32, #tpu.memory_space<vmem>>, %arg2: memref<3x64x128xf32, #tpu.memory_space<vmem>>, %arg3: memref<1x8xf32, #tpu.memory_space<vmem>>, %arg4: memref<1x8xf32, #tpu.memory_space<vmem>>, %arg5: memref<1x8xf32, #tpu.memory_space<vmem>>, %arg6: memref<32x128xf32, #tpu.memory_space<vmem>>, %arg7: memref<2x18x64xf32, #tpu.memory_space<vmem>>) attributes {dimension_semantics = [#tpu.dimension_semantics<arbitrary>], iteration_bounds = array<i64: 1>, scalar_prefetch = 0 : i64, scratch_operands = 1 : i64, tpu.core_type = #tpu.core_type<tc>, window_params = [{pipeline_mode = #tpu.pipeline_mode<synchronous>, transform_indices = @transform_0, window_bounds = array<i64: 2, 4, 16, 16>}, {pipeline_mode = #tpu.pipeline_mode<synchronous>, transform_indices = @transform_1, window_bounds = array<i64: 3, 64, 128>}, {pipeline_mode = #tpu.pipeline_mode<synchronous>, transform_indices = @transform_2, window_bounds = array<i64: 1, 8>}, {pipeline_mode = #tpu.pipeline_mode<synchronous>, transform_indices = @transform_3, window_bounds = array<i64: 1, 8>}, {pipeline_mode = #tpu.pipeline_mode<synchronous>, transform_indices = @transform_4, window_bounds = array<i64: 1, 8>}, {pipeline_mode = #tpu.pipeline_mode<synchronous>, transform_indices = @transform_5, window_bounds = array<i64: 32, 128>}]} {
    %cst = arith.constant 0.000000e+00 : f32
    %0 = vector.broadcast %cst : f32 to vector<1x64xf32>
    %c0 = arith.constant 0 : index
    %c0_0 = arith.constant 0 : index
    %c0_1 = arith.constant 0 : index
    %1 = vector.load %arg7[%c0, %c0_0, %c0_1] : memref<2x18x64xf32, #tpu.memory_space<vmem>>, vector<1x1x64xf32>
    %2 = vector.shape_cast %1 : vector<1x1x64xf32> to vector<1x64xf32>
    %3 = vector.shape_cast %0 : vector<1x64xf32> to vector<1x1x64xf32>
    tpu.vector_store %arg7[%c0, %c0_0, %c0_1], %3 {strides = array<i32>} : memref<2x18x64xf32, #tpu.memory_space<vmem>>, vector<1x1x64xf32>,
    %c0_2 = arith.constant 0 : index
    %c17 = arith.constant 17 : index
    %c0_3 = arith.constant 0 : index
    %4 = vector.load %arg7[%c0_2, %c17, %c0_3] : memref<2x18x64xf32, #tpu.memory_space<vmem>>, vector<1x1x64xf32>
    %5 = vector.shape_cast %4 : vector<1x1x64xf32> to vector<1x64xf32>
    %6 = vector.shape_cast %0 : vector<1x64xf32> to vector<1x1x64xf32>
    tpu.vector_store %arg7[%c0_2, %c17, %c0_3], %6 {strides = array<i32>} : memref<2x18x64xf32, #tpu.memory_space<vmem>>, vector<1x1x64xf32>,
    %c0_4 = arith.constant 0 : index
    %c0_5 = arith.constant 0 : index
    %c0_6 = arith.constant 0 : index
    %c0_7 = arith.constant 0 : index
    %7 = vector.load %arg1[%c0_4, %c0_5, %c0_6, %c0_7] : memref<2x4x16x16xf32, #tpu.memory_space<vmem>>, vector<1x1x16x16xf32>
    %8 = vector.shape_cast %7 : vector<1x1x16x16xf32> to vector<16x16xf32>
    %c0_8 = arith.constant 0 : index
    %c1 = arith.constant 1 : index
    %c0_9 = arith.constant 0 : index
    %9 = vector.load %arg7[%c0_8, %c1, %c0_9] : memref<2x18x64xf32, #tpu.memory_space<vmem>>, vector<1x16x16xf32>
    %10 = vector.shape_cast %9 : vector<1x16x16xf32> to vector<16x16xf32>
    %11 = vector.shape_cast %8 : vector<16x16xf32> to vector<1x16x16xf32>
    tpu.vector_store %arg7[%c0_8, %c1, %c0_9], %11 {strides = array<i32>} : memref<2x18x64xf32, #tpu.memory_space<vmem>>, vector<1x16x16xf32>,
    %c0_10 = arith.constant 0 : index
    %c1_11 = arith.constant 1 : index
    %c0_12 = arith.constant 0 : index
    %c0_13 = arith.constant 0 : index
    %12 = vector.load %arg1[%c0_10, %c1_11, %c0_12, %c0_13] : memref<2x4x16x16xf32, #tpu.memory_space<vmem>>, vector<1x1x16x16xf32>
    %13 = vector.shape_cast %12 : vector<1x1x16x16xf32> to vector<16x16xf32>
    %c0_14 = arith.constant 0 : index
    %c1_15 = arith.constant 1 : index
    %c16 = arith.constant 16 : index
    %14 = vector.load %arg7[%c0_14, %c1_15, %c16] : memref<2x18x64xf32, #tpu.memory_space<vmem>>, vector<1x16x16xf32>
    %15 = vector.shape_cast %14 : vector<1x16x16xf32> to vector<16x16xf32>
    %16 = vector.shape_cast %13 : vector<16x16xf32> to vector<1x16x16xf32>
    tpu.vector_store %arg7[%c0_14, %c1_15, %c16], %16 {strides = array<i32>} : memref<2x18x64xf32, #tpu.memory_space<vmem>>, vector<1x16x16xf32>,
    %c0_16 = arith.constant 0 : index
    %c2 = arith.constant 2 : index
    %c0_17 = arith.constant 0 : index
    %c0_18 = arith.constant 0 : index
    %17 = vector.load %arg1[%c0_16, %c2, %c0_17, %c0_18] : memref<2x4x16x16xf32, #tpu.memory_space<vmem>>, vector<1x1x16x16xf32>
    %18 = vector.shape_cast %17 : vector<1x1x16x16xf32> to vector<16x16xf32>
    %c0_19 = arith.constant 0 : index
    %c1_20 = arith.constant 1 : index
    %c32 = arith.constant 32 : index
    %19 = vector.load %arg7[%c0_19, %c1_20, %c32] : memref<2x18x64xf32, #tpu.memory_space<vmem>>, vector<1x16x16xf32>
    %20 = vector.shape_cast %19 : vector<1x16x16xf32> to vector<16x16xf32>
    %21 = vector.shape_cast %18 : vector<16x16xf32> to vector<1x16x16xf32>
    tpu.vector_store %arg7[%c0_19, %c1_20, %c32], %21 {strides = array<i32>} : memref<2x18x64xf32, #tpu.memory_space<vmem>>, vector<1x16x16xf32>,
    %c0_21 = arith.constant 0 : index
    %c3 = arith.constant 3 : index
    %c0_22 = arith.constant 0 : index
    %c0_23 = arith.constant 0 : index
    %22 = vector.load %arg1[%c0_21, %c3, %c0_22, %c0_23] : memref<2x4x16x16xf32, #tpu.memory_space<vmem>>, vector<1x1x16x16xf32>
    %23 = vector.shape_cast %22 : vector<1x1x16x16xf32> to vector<16x16xf32>
    %c0_24 = arith.constant 0 : index
    %c1_25 = arith.constant 1 : index
    %c48 = arith.constant 48 : index
    %24 = vector.load %arg7[%c0_24, %c1_25, %c48] : memref<2x18x64xf32, #tpu.memory_space<vmem>>, vector<1x16x16xf32>
    %25 = vector.shape_cast %24 : vector<1x16x16xf32> to vector<16x16xf32>
    %26 = vector.shape_cast %23 : vector<16x16xf32> to vector<1x16x16xf32>
    tpu.vector_store %arg7[%c0_24, %c1_25, %c48], %26 {strides = array<i32>} : memref<2x18x64xf32, #tpu.memory_space<vmem>>, vector<1x16x16xf32>,
    %c1_26 = arith.constant 1 : index
    %c0_27 = arith.constant 0 : index
    %c0_28 = arith.constant 0 : index
    %27 = vector.load %arg7[%c1_26, %c0_27, %c0_28] : memref<2x18x64xf32, #tpu.memory_space<vmem>>, vector<1x1x64xf32>
    %28 = vector.shape_cast %27 : vector<1x1x64xf32> to vector<1x64xf32>
    %29 = vector.shape_cast %0 : vector<1x64xf32> to vector<1x1x64xf32>
    tpu.vector_store %arg7[%c1_26, %c0_27, %c0_28], %29 {strides = array<i32>} : memref<2x18x64xf32, #tpu.memory_space<vmem>>, vector<1x1x64xf32>,
    %c1_29 = arith.constant 1 : index
    %c17_30 = arith.constant 17 : index
    %c0_31 = arith.constant 0 : index
    %30 = vector.load %arg7[%c1_29, %c17_30, %c0_31] : memref<2x18x64xf32, #tpu.memory_space<vmem>>, vector<1x1x64xf32>
    %31 = vector.shape_cast %30 : vector<1x1x64xf32> to vector<1x64xf32>
    %32 = vector.shape_cast %0 : vector<1x64xf32> to vector<1x1x64xf32>
    tpu.vector_store %arg7[%c1_29, %c17_30, %c0_31], %32 {strides = array<i32>} : memref<2x18x64xf32, #tpu.memory_space<vmem>>, vector<1x1x64xf32>,
    %c1_32 = arith.constant 1 : index
    %c0_33 = arith.constant 0 : index
    %c0_34 = arith.constant 0 : index
    %c0_35 = arith.constant 0 : index
    %33 = vector.load %arg1[%c1_32, %c0_33, %c0_34, %c0_35] : memref<2x4x16x16xf32, #tpu.memory_space<vmem>>, vector<1x1x16x16xf32>
    %34 = vector.shape_cast %33 : vector<1x1x16x16xf32> to vector<16x16xf32>
    %c1_36 = arith.constant 1 : index
    %c1_37 = arith.constant 1 : index
    %c0_38 = arith.constant 0 : index
    %35 = vector.load %arg7[%c1_36, %c1_37, %c0_38] : memref<2x18x64xf32, #tpu.memory_space<vmem>>, vector<1x16x16xf32>
    %36 = vector.shape_cast %35 : vector<1x16x16xf32> to vector<16x16xf32>
    %37 = vector.shape_cast %34 : vector<16x16xf32> to vector<1x16x16xf32>
    tpu.vector_store %arg7[%c1_36, %c1_37, %c0_38], %37 {strides = array<i32>} : memref<2x18x64xf32, #tpu.memory_space<vmem>>, vector<1x16x16xf32>,
    %c1_39 = arith.constant 1 : index
    %c1_40 = arith.constant 1 : index
    %c0_41 = arith.constant 0 : index
    %c0_42 = arith.constant 0 : index
    %38 = vector.load %arg1[%c1_39, %c1_40, %c0_41, %c0_42] : memref<2x4x16x16xf32, #tpu.memory_space<vmem>>, vector<1x1x16x16xf32>
    %39 = vector.shape_cast %38 : vector<1x1x16x16xf32> to vector<16x16xf32>
    %c1_43 = arith.constant 1 : index
    %c1_44 = arith.constant 1 : index
    %c16_45 = arith.constant 16 : index
    %40 = vector.load %arg7[%c1_43, %c1_44, %c16_45] : memref<2x18x64xf32, #tpu.memory_space<vmem>>, vector<1x16x16xf32>
    %41 = vector.shape_cast %40 : vector<1x16x16xf32> to vector<16x16xf32>
    %42 = vector.shape_cast %39 : vector<16x16xf32> to vector<1x16x16xf32>
    tpu.vector_store %arg7[%c1_43, %c1_44, %c16_45], %42 {strides = array<i32>} : memref<2x18x64xf32, #tpu.memory_space<vmem>>, vector<1x16x16xf32>,
    %c1_46 = arith.constant 1 : index
    %c2_47 = arith.constant 2 : index
    %c0_48 = arith.constant 0 : index
    %c0_49 = arith.constant 0 : index
    %43 = vector.load %arg1[%c1_46, %c2_47, %c0_48, %c0_49] : memref<2x4x16x16xf32, #tpu.memory_space<vmem>>, vector<1x1x16x16xf32>
    %44 = vector.shape_cast %43 : vector<1x1x16x16xf32> to vector<16x16xf32>
    %c1_50 = arith.constant 1 : index
    %c1_51 = arith.constant 1 : index
    %c32_52 = arith.constant 32 : index
    %45 = vector.load %arg7[%c1_50, %c1_51, %c32_52] : memref<2x18x64xf32, #tpu.memory_space<vmem>>, vector<1x16x16xf32>
    %46 = vector.shape_cast %45 : vector<1x16x16xf32> to vector<16x16xf32>
    %47 = vector.shape_cast %44 : vector<16x16xf32> to vector<1x16x16xf32>
    tpu.vector_store %arg7[%c1_50, %c1_51, %c32_52], %47 {strides = array<i32>} : memref<2x18x64xf32, #tpu.memory_space<vmem>>, vector<1x16x16xf32>,
    %c1_53 = arith.constant 1 : index
    %c3_54 = arith.constant 3 : index
    %c0_55 = arith.constant 0 : index
    %c0_56 = arith.constant 0 : index
    %48 = vector.load %arg1[%c1_53, %c3_54, %c0_55, %c0_56] : memref<2x4x16x16xf32, #tpu.memory_space<vmem>>, vector<1x1x16x16xf32>
    %49 = vector.shape_cast %48 : vector<1x1x16x16xf32> to vector<16x16xf32>
    %c1_57 = arith.constant 1 : index
    %c1_58 = arith.constant 1 : index
    %c48_59 = arith.constant 48 : index
    %50 = vector.load %arg7[%c1_57, %c1_58, %c48_59] : memref<2x18x64xf32, #tpu.memory_space<vmem>>, vector<1x16x16xf32>
    %51 = vector.shape_cast %50 : vector<1x16x16xf32> to vector<16x16xf32>
    %52 = vector.shape_cast %49 : vector<16x16xf32> to vector<1x16x16xf32>
    tpu.vector_store %arg7[%c1_57, %c1_58, %c48_59], %52 {strides = array<i32>} : memref<2x18x64xf32, #tpu.memory_space<vmem>>, vector<1x16x16xf32>,
    %c0_60 = arith.constant 0 : index
    %c1_61 = arith.constant 1 : index
    %c0_62 = arith.constant 0 : index
    %53 = vector.load %arg7[%c0_60, %c1_61, %c0_62] : memref<2x18x64xf32, #tpu.memory_space<vmem>>, vector<1x16x64xf32>
    %54 = vector.shape_cast %53 : vector<1x16x64xf32> to vector<16x64xf32>
    %c1_63 = arith.constant 1 : index
    %c1_64 = arith.constant 1 : index
    %c0_65 = arith.constant 0 : index
    %55 = vector.load %arg7[%c1_63, %c1_64, %c0_65] : memref<2x18x64xf32, #tpu.memory_space<vmem>>, vector<1x16x64xf32>
    %56 = vector.shape_cast %55 : vector<1x16x64xf32> to vector<16x64xf32>
    %57 = tpu.concatenate %54, %56 in 0 : vector<16x64xf32>, vector<16x64xf32> -> vector<32x64xf32>
    %c1_66 = arith.constant 1 : index
    %c0_67 = arith.constant 0 : index
    %c0_68 = arith.constant 0 : index
    %58 = vector.load %arg2[%c1_66, %c0_67, %c0_68] : memref<3x64x128xf32, #tpu.memory_space<vmem>>, vector<1x64x128xf32>
    %59 = vector.shape_cast %58 : vector<1x64x128xf32> to vector<64x128xf32>
    %cst_69 = arith.constant dense<0.000000e+00> : vector<32x128xf32>
    %60 = tpu.matmul %57, %59, %cst_69 {dimension_numbers = #tpu.dot_dimension_numbers<[1], [0], [0], [1], [0, 0, 1, 1], [], []>} : vector<32x64xf32>, vector<64x128xf32>, vector<32x128xf32> -> vector<32x128xf32>
    %c0_70 = arith.constant 0 : index
    %c0_71 = arith.constant 0 : index
    %c0_72 = arith.constant 0 : index
    %61 = vector.load %arg7[%c0_70, %c0_71, %c0_72] : memref<2x18x64xf32, #tpu.memory_space<vmem>>, vector<1x16x64xf32>
    %62 = vector.shape_cast %61 : vector<1x16x64xf32> to vector<16x64xf32>
    %c1_73 = arith.constant 1 : index
    %c0_74 = arith.constant 0 : index
    %c0_75 = arith.constant 0 : index
    %63 = vector.load %arg7[%c1_73, %c0_74, %c0_75] : memref<2x18x64xf32, #tpu.memory_space<vmem>>, vector<1x16x64xf32>
    %64 = vector.shape_cast %63 : vector<1x16x64xf32> to vector<16x64xf32>
    %65 = tpu.concatenate %62, %64 in 0 : vector<16x64xf32>, vector<16x64xf32> -> vector<32x64xf32>
    %c0_76 = arith.constant 0 : index
    %c0_77 = arith.constant 0 : index
    %c0_78 = arith.constant 0 : index
    %66 = vector.load %arg2[%c0_76, %c0_77, %c0_78] : memref<3x64x128xf32, #tpu.memory_space<vmem>>, vector<1x64x128xf32>
    %67 = vector.shape_cast %66 : vector<1x64x128xf32> to vector<64x128xf32>
    %cst_79 = arith.constant dense<0.000000e+00> : vector<32x128xf32>
    %68 = tpu.matmul %65, %67, %cst_79 {dimension_numbers = #tpu.dot_dimension_numbers<[1], [0], [0], [1], [0, 0, 1, 1], [], []>} : vector<32x64xf32>, vector<64x128xf32>, vector<32x128xf32> -> vector<32x128xf32>
    %69 = arith.addf %60, %68 : vector<32x128xf32>
    %c0_80 = arith.constant 0 : index
    %c2_81 = arith.constant 2 : index
    %c0_82 = arith.constant 0 : index
    %70 = vector.load %arg7[%c0_80, %c2_81, %c0_82] : memref<2x18x64xf32, #tpu.memory_space<vmem>>, vector<1x16x64xf32>
    %71 = vector.shape_cast %70 : vector<1x16x64xf32> to vector<16x64xf32>
    %c1_83 = arith.constant 1 : index
    %c2_84 = arith.constant 2 : index
    %c0_85 = arith.constant 0 : index
    %72 = vector.load %arg7[%c1_83, %c2_84, %c0_85] : memref<2x18x64xf32, #tpu.memory_space<vmem>>, vector<1x16x64xf32>
    %73 = vector.shape_cast %72 : vector<1x16x64xf32> to vector<16x64xf32>
    %74 = tpu.concatenate %71, %73 in 0 : vector<16x64xf32>, vector<16x64xf32> -> vector<32x64xf32>
    %c2_86 = arith.constant 2 : index
    %c0_87 = arith.constant 0 : index
    %c0_88 = arith.constant 0 : index
    %75 = vector.load %arg2[%c2_86, %c0_87, %c0_88] : memref<3x64x128xf32, #tpu.memory_space<vmem>>, vector<1x64x128xf32>
    %76 = vector.shape_cast %75 : vector<1x64x128xf32> to vector<64x128xf32>
    %cst_89 = arith.constant dense<0.000000e+00> : vector<32x128xf32>
    %77 = tpu.matmul %74, %76, %cst_89 {dimension_numbers = #tpu.dot_dimension_numbers<[1], [0], [0], [1], [0, 0, 1, 1], [], []>} : vector<32x64xf32>, vector<64x128xf32>, vector<32x128xf32> -> vector<32x128xf32>
    %78 = arith.addf %69, %77 : vector<32x128xf32>
    %79 = tpu.iota {dimensions = array<i32: 0>} : vector<128x8xi32>
    %c8_i32 = arith.constant 8 : i32
    %c0_i32 = arith.constant 0 : i32
    %80 = arith.cmpi eq, %c8_i32, %c0_i32 : i32
    %c1_i32 = arith.constant 1 : i32
    %81 = arith.select %80, %c1_i32, %c8_i32 : i32
    %82 = vector.broadcast %81 : i32 to vector<128x8xi32>
    %83 = arith.remsi %79, %82 : vector<128x8xi32>
    %c0_i32_90 = arith.constant 0 : i32
    %84 = vector.broadcast %c0_i32_90 : i32 to vector<128x8xi32>
    %85 = arith.cmpi ne, %83, %84 : vector<128x8xi32>
    %c0_i32_91 = arith.constant 0 : i32
    %86 = vector.broadcast %c0_i32_91 : i32 to vector<128x8xi32>
    %87 = arith.cmpi slt, %83, %86 : vector<128x8xi32>
    %c0_i32_92 = arith.constant 0 : i32
    %88 = arith.cmpi slt, %81, %c0_i32_92 : i32
    %89 = vector.broadcast %88 : i1 to vector<128x8xi1>
    %90 = vector.broadcast %89 : vector<128x8xi1> to vector<128x8xi1>
    %91 = arith.xori %87, %90 : vector<128x8xi1>
    %92 = arith.andi %91, %85 : vector<128x8xi1>
    %93 = vector.broadcast %81 : i32 to vector<128x8xi32>
    %94 = arith.addi %83, %93 : vector<128x8xi32>
    %95 = arith.select %92, %94, %83 : vector<128x8xi1>, vector<128x8xi32>
    %96 = tpu.iota {dimensions = array<i32: 1>} : vector<128x8xi32>
    %97 = arith.cmpi eq, %95, %96 : vector<128x8xi32>
    %98 = arith.extui %97 : vector<128x8xi1> to vector<128x8xi32>
    %99 = arith.sitofp %98 : vector<128x8xi32> to vector<128x8xf32>
    %100 = tpu.iota {dimensions = array<i32: 1>} : vector<8x128xi32>
    %c8_i32_93 = arith.constant 8 : i32
    %c0_i32_94 = arith.constant 0 : i32
    %101 = arith.cmpi eq, %c8_i32_93, %c0_i32_94 : i32
    %c1_i32_95 = arith.constant 1 : i32
    %102 = arith.select %101, %c1_i32_95, %c8_i32_93 : i32
    %103 = vector.broadcast %102 : i32 to vector<8x128xi32>
    %104 = arith.remsi %100, %103 : vector<8x128xi32>
    %c0_i32_96 = arith.constant 0 : i32
    %105 = vector.broadcast %c0_i32_96 : i32 to vector<8x128xi32>
    %106 = arith.cmpi ne, %104, %105 : vector<8x128xi32>
    %c0_i32_97 = arith.constant 0 : i32
    %107 = vector.broadcast %c0_i32_97 : i32 to vector<8x128xi32>
    %108 = arith.cmpi slt, %104, %107 : vector<8x128xi32>
    %c0_i32_98 = arith.constant 0 : i32
    %109 = arith.cmpi slt, %102, %c0_i32_98 : i32
    %110 = vector.broadcast %109 : i1 to vector<8x128xi1>
    %111 = vector.broadcast %110 : vector<8x128xi1> to vector<8x128xi1>
    %112 = arith.xori %108, %111 : vector<8x128xi1>
    %113 = arith.andi %112, %106 : vector<8x128xi1>
    %114 = vector.broadcast %102 : i32 to vector<8x128xi32>
    %115 = arith.addi %104, %114 : vector<8x128xi32>
    %116 = arith.select %113, %115, %104 : vector<8x128xi1>, vector<8x128xi32>
    %117 = tpu.iota {dimensions = array<i32: 0>} : vector<8x128xi32>
    %118 = arith.cmpi eq, %116, %117 : vector<8x128xi32>
    %119 = arith.extui %118 : vector<8x128xi1> to vector<8x128xi32>
    %120 = arith.sitofp %119 : vector<8x128xi32> to vector<8x128xf32>
    %c0_99 = arith.constant 0 : index
    %c0_100 = arith.constant 0 : index
    %121 = vector.load %arg3[%c0_99, %c0_100] : memref<1x8xf32, #tpu.memory_space<vmem>>, vector<1x8xf32>
    %cst_101 = arith.constant dense<0.000000e+00> : vector<1x128xf32>
    %122 = tpu.matmul %121, %120, %cst_101 {dimension_numbers = #tpu.dot_dimension_numbers<[1], [0], [0], [1], [0, 0, 1, 1], [], []>} : vector<1x8xf32>, vector<8x128xf32>, vector<1x128xf32> -> vector<1x128xf32>
    %123 = vector.broadcast %122 : vector<1x128xf32> to vector<32x128xf32>
    %124 = arith.addf %78, %123 : vector<32x128xf32>
    %cst_102 = arith.constant dense<0.000000e+00> : vector<128xf32>
    %125 = vector.multi_reduction <add>, %124, %cst_102 [0] : vector<32x128xf32> to vector<128xf32>
    %126 = vector.shape_cast %125 : vector<128xf32> to vector<1x128xf32>
    %cst_103 = arith.constant dense<0.000000e+00> : vector<1x8xf32>
    %127 = tpu.matmul %126, %99, %cst_103 {dimension_numbers = #tpu.dot_dimension_numbers<[1], [0], [0], [1], [0, 0, 1, 1], [], []>} : vector<1x128xf32>, vector<128x8xf32>, vector<1x8xf32> -> vector<1x8xf32>
    %cst_104 = arith.constant 0.001953125 : f32
    %128 = vector.broadcast %cst_104 : f32 to vector<1x8xf32>
    %129 = arith.mulf %127, %128 : vector<1x8xf32>
    %cst_105 = arith.constant dense<0.000000e+00> : vector<1x128xf32>
    %130 = tpu.matmul %129, %120, %cst_105 {dimension_numbers = #tpu.dot_dimension_numbers<[1], [0], [0], [1], [0, 0, 1, 1], [], []>} : vector<1x8xf32>, vector<8x128xf32>, vector<1x128xf32> -> vector<1x128xf32>
    %131 = vector.broadcast %130 : vector<1x128xf32> to vector<32x128xf32>
    %132 = arith.subf %124, %131 : vector<32x128xf32>
    %133 = arith.mulf %132, %132 : vector<32x128xf32>
    %cst_106 = arith.constant dense<0.000000e+00> : vector<128xf32>
    %134 = vector.multi_reduction <add>, %133, %cst_106 [0] : vector<32x128xf32> to vector<128xf32>
    %135 = vector.shape_cast %134 : vector<128xf32> to vector<1x128xf32>
    %cst_107 = arith.constant dense<0.000000e+00> : vector<1x8xf32>
    %136 = tpu.matmul %135, %99, %cst_107 {dimension_numbers = #tpu.dot_dimension_numbers<[1], [0], [0], [1], [0, 0, 1, 1], [], []>} : vector<1x128xf32>, vector<128x8xf32>, vector<1x8xf32> -> vector<1x8xf32>
    %cst_108 = arith.constant 0.001953125 : f32
    %137 = vector.broadcast %cst_108 : f32 to vector<1x8xf32>
    %138 = arith.mulf %136, %137 : vector<1x8xf32>
    %c0_109 = arith.constant 0 : index
    %c0_110 = arith.constant 0 : index
    %139 = vector.load %arg4[%c0_109, %c0_110] : memref<1x8xf32, #tpu.memory_space<vmem>>, vector<1x8xf32>
    %cst_111 = arith.constant 9.99999974E-6 : f32
    %140 = vector.broadcast %cst_111 : f32 to vector<1x8xf32>
    %141 = arith.addf %138, %140 : vector<1x8xf32>
    %142 = math.rsqrt %141 : vector<1x8xf32>
    %143 = arith.mulf %139, %142 : vector<1x8xf32>
    %cst_112 = arith.constant dense<0.000000e+00> : vector<1x128xf32>
    %144 = tpu.matmul %143, %120, %cst_112 {dimension_numbers = #tpu.dot_dimension_numbers<[1], [0], [0], [1], [0, 0, 1, 1], [], []>} : vector<1x8xf32>, vector<8x128xf32>, vector<1x128xf32> -> vector<1x128xf32>
    %c0_113 = arith.constant 0 : index
    %c0_114 = arith.constant 0 : index
    %145 = vector.load %arg5[%c0_113, %c0_114] : memref<1x8xf32, #tpu.memory_space<vmem>>, vector<1x8xf32>
    %cst_115 = arith.constant dense<0.000000e+00> : vector<1x128xf32>
    %146 = tpu.matmul %145, %120, %cst_115 {dimension_numbers = #tpu.dot_dimension_numbers<[1], [0], [0], [1], [0, 0, 1, 1], [], []>} : vector<1x8xf32>, vector<8x128xf32>, vector<1x128xf32> -> vector<1x128xf32>
    %147 = vector.broadcast %144 : vector<1x128xf32> to vector<32x128xf32>
    %148 = arith.mulf %132, %147 : vector<32x128xf32>
    %149 = vector.broadcast %146 : vector<1x128xf32> to vector<32x128xf32>
    %150 = arith.addf %148, %149 : vector<32x128xf32>
    %cst_116 = arith.constant 0.000000e+00 : f32
    %151 = vector.broadcast %cst_116 : f32 to vector<32x128xf32>
    %152 = arith.maximumf %150, %151 : vector<32x128xf32>
    %c0_117 = arith.constant 0 : index
    %c0_118 = arith.constant 0 : index
    %153 = vector.load %arg6[%c0_117, %c0_118] : memref<32x128xf32, #tpu.memory_space<vmem>>, vector<32x128xf32>
    tpu.vector_store %arg6[%c0_117, %c0_118], %152 {strides = array<i32>} : memref<32x128xf32, #tpu.memory_space<vmem>>, vector<32x128xf32>,
    return
  }
  func.func @transform_0(%arg0: i32) -> (i32, i32, i32, i32) {
    %c0_i32 = arith.constant 0 : i32
    %c0_i32_0 = arith.constant 0 : i32
    %c0_i32_1 = arith.constant 0 : i32
    %c0_i32_2 = arith.constant 0 : i32
    %c0_i32_3 = arith.constant 0 : i32
    return %c0_i32, %c0_i32_0, %c0_i32_1, %c0_i32_2 : i32, i32, i32, i32
  }
  func.func @transform_1(%arg0: i32) -> (i32, i32, i32) {
    %c0_i32 = arith.constant 0 : i32
    %c0_i32_0 = arith.constant 0 : i32
    %c0_i32_1 = arith.constant 0 : i32
    %c0_i32_2 = arith.constant 0 : i32
    return %c0_i32, %c0_i32_0, %c0_i32_1 : i32, i32, i32
  }
  func.func @transform_2(%arg0: i32) -> (i32, i32) {
    %c0_i32 = arith.constant 0 : i32
    %c0_i32_0 = arith.constant 0 : i32
    %c0_i32_1 = arith.constant 0 : i32
    return %c0_i32, %c0_i32_0 : i32, i32
  }
  func.func @transform_3(%arg0: i32) -> (i32, i32) {
    %c0_i32 = arith.constant 0 : i32
    %c0_i32_0 = arith.constant 0 : i32
    %c0_i32_1 = arith.constant 0 : i32
    return %c0_i32, %c0_i32_0 : i32, i32
  }
  func.func @transform_4(%arg0: i32) -> (i32, i32) {
    %c0_i32 = arith.constant 0 : i32
    %c0_i32_0 = arith.constant 0 : i32
    %c0_i32_1 = arith.constant 0 : i32
    return %c0_i32, %c0_i32_0 : i32, i32
  }
  func.func @transform_5(%arg0: i32) -> (i32, i32) {
    %c0_i32 = arith.constant 0 : i32
    %c0_i32_0 = arith.constant 0 : i32
    %c0_i32_1 = arith.constant 0 : i32
    return %c0_i32, %c0_i32_0 : i32, i32
  }
}

</mosaic_0001>

<llo_original>
// kernel: tpu_custom_call.1
$region0: #{tpu_custom_call.1}
  #allocation0 [shape = 'u32[]', space=smem, size = 0x4, offset = 0x4, fixed_abs, tag = 'smem constant byte address 0x4 - core index']
  #allocation1 [shape = 'u32[72,128]{1,0:T(1,128)}', space=vmem, size = 0x9000, scoped, tag = 'internal scratch']
  #allocation2 [shape = 'f32[2,18,64]{2,1,0:T(8,128)}', space=vmem, size = 0x6000, scoped, tag = 'scratch operand']
  %s0 = inlined_call_operand.hbm [shape: f32[2,4,16,16], index: 0, kind: input, shape index: {}]
  %s1 = inlined_call_operand.hbm [shape: f32[3,64,128], index: 1, kind: input, shape index: {}]
  %s2 = inlined_call_operand.vmem [shape: f32[1,8], index: 2, kind: input, shape index: {}]
  %s3 = inlined_call_operand.vmem [shape: f32[1,8], index: 3, kind: input, shape index: {}]
  %s4 = inlined_call_operand.vmem [shape: f32[1,8], index: 4, kind: input, shape index: {}]
  %s5 = inlined_call_operand.hbm [shape: f32[32,128], index: 5, kind: output, shape index: {}]
  %s6 = sld [smem:[#allocation0]]
  $region38: #{tpu_custom_call.1} parent=0
    _
  %s8 = ssub.s32 1, %s6
  %s9 = scalar_select 0, %s8, %s6
  $region1: #{tpu_custom_call.1} parent=0
    #allocation3 [shape = 'u8[65536]{0}', space=vmem, size = 0x10000, scoped, tag = 'input window, operand 0, single buffered']
    #allocation4 [shape = 's32[1]{0}', space=sflag, size = 0x4, scoped, tag = 'scoped memory for tpu_custom_call.1']
    #allocation5 [shape = 's32[1]{0}', space=sflag, size = 0x4, scoped, tag = 'scoped memory for tpu_custom_call.1']
    #allocation6 [shape = 'u8[98304]{0}', space=vmem, size = 0x18000, scoped, tag = 'input window, operand 1, single buffered']
    #allocation7 [shape = 's32[1]{0}', space=sflag, size = 0x4, scoped, tag = 'scoped memory for tpu_custom_call.1']
    #allocation8 [shape = 'u8[16384]{0}', space=vmem, size = 0x4000, scoped, tag = 'output window, operand 0, single buffered']
    %10 = vsyncpa [#allocation4], 0
    %11 = vsyncpa [#allocation7], 0
    %12 = vsyncpa [#allocation5], 0
    // Predicated region
    $region2: #{tpu_custom_call.1} parent=1 // pred_check
      _
    $region3: #{tpu_custom_call.1} parent=1 // pred_check_branch
      %14 = sbr.rel (0) target = $region5
    $region4: #{tpu_custom_call.1} parent=1 // pred_region
      %16 = vsyncadd [#allocation4], 0
      %s17 = sshll.u32 %s0, 4
      %s18 = int_to_ptr.hbm [resolvable:$true] %s17
      %s19 = sshll.u32 [#allocation3], 4
      %s20 = int_to_ptr.vmem [resolvable:$true] %s19
      %25 = dma.hbm_to_vmem [thread:$0]  %s18, 2048, %s20, [#allocation4], 128, 128, 8
    $region5: #{tpu_custom_call.1} parent=1 // pred_fallthru
      _
    // Predicated region
    $region6: #{tpu_custom_call.1} parent=1 // pred_check
      _
    $region7: #{tpu_custom_call.1} parent=1 // pred_check_branch
      %27 = sbr.rel (0) target = $region9
    $region8: #{tpu_custom_call.1} parent=1 // pred_region
      %29 = vsyncadd [#allocation7], 0
      %s30 = sshll.u32 %s1, 4
      %s31 = int_to_ptr.hbm [resolvable:$true] %s30
      %s32 = sshll.u32 [#allocation6], 4
      %s33 = int_to_ptr.vmem [resolvable:$true] %s32
      %38 = dma.hbm_to_vmem [thread:$0]  %s31, 3072, %s33, [#allocation7], 128, 128, 8
    $region9: #{tpu_custom_call.1} parent=1 // pred_fallthru
      _
    // Predicated region
    $region10: #{tpu_custom_call.1} parent=1 // pred_check
      _
    $region11: #{tpu_custom_call.1} parent=1 // pred_check_branch
      %40 = sbr.rel (0) target = $region13
    $region12: #{tpu_custom_call.1} parent=1 // pred_region
      _
    $region13: #{tpu_custom_call.1} parent=1 // pred_fallthru
      _
    // Predicated region
    $region14: #{tpu_custom_call.1} parent=1 // pred_check
      _
    $region15: #{tpu_custom_call.1} parent=1 // pred_check_branch
      %42 = sbr.rel (0) target = $region17
    $region16: #{tpu_custom_call.1} parent=1 // pred_region
      _
    $region17: #{tpu_custom_call.1} parent=1 // pred_fallthru
      _
    // Predicated region
    $region18: #{tpu_custom_call.1} parent=1 // pred_check
      _
    $region19: #{tpu_custom_call.1} parent=1 // pred_check_branch
      %44 = sbr.rel (0) target = $region21
    $region20: #{tpu_custom_call.1} parent=1 // pred_region
      _
    $region21: #{tpu_custom_call.1} parent=1 // pred_fallthru
      _
    // Predicated region
    $region22: #{tpu_custom_call.1} parent=1 // pred_check
      _
    $region23: #{tpu_custom_call.1} parent=1 // pred_check_branch
      %46 = sbr.rel (0) target = $region25
    $region24: #{tpu_custom_call.1} parent=1 // pred_region
      %48 = dma.done [#allocation4], 2048
    $region25: #{tpu_custom_call.1} parent=1 // pred_fallthru
      _
    // Predicated region
    $region26: #{tpu_custom_call.1} parent=1 // pred_check
      _
    $region27: #{tpu_custom_call.1} parent=1 // pred_check_branch
      %50 = sbr.rel (0) target = $region29
    $region28: #{tpu_custom_call.1} parent=1 // pred_region
      %52 = dma.done [#allocation7], 3072
    $region29: #{tpu_custom_call.1} parent=1 // pred_fallthru
      _
    %vm53 = vcmask 516096
    %54 = vst.msk [vmem:[#allocation2] sm:$0x1] %vm53, 0.0
    %55 = vst.msk [vmem:[#allocation2 + $0x11] sm:$0x1] %vm53, 0.0
    %v56 = vld [vmem:[#allocation3] sm:$0xff]
    %v57 = vld [vmem:[#allocation3 + $0x8] sm:$0xff]
    %vm58 = vcmask 130048
    %59 = vst.msk [vmem:[#allocation2 + $0x1] sm:$0xff] %vm58, %v56
    %60 = vst.msk [vmem:[#allocation2 + $0x9] sm:$0xff] %vm58, %v57
    %s61 = scalar_lea.vmem [#allocation3], 16
    %v62 = vld [vmem:[%s61] sm:$0xff]
    %v63 = vld [vmem:[%s61 + $0x8] sm:$0xff]
    %66 = vrot.lane.b32.xlu0 %v62, 16
    %v67 = vpop.permute.xlu0 %66
    %68 = vrot.lane.b32.xlu0 %v63, 16
    %v69 = vpop.permute.xlu0 %68
    %vm72 = vcmask 261248
    %73 = vst.msk [vmem:[#allocation2 + $0x1] sm:$0xff] %vm72, %v67
    %74 = vst.msk [vmem:[#allocation2 + $0x9] sm:$0xff] %vm72, %v69
    %s75 = scalar_lea.vmem [#allocation3], 32
    %v76 = vld [vmem:[%s75] sm:$0xff]
    %v77 = vld [vmem:[%s75 + $0x8] sm:$0xff]
    %80 = vrot.lane.b32.xlu0 %v76, 32
    %v81 = vpop.permute.xlu0 %80
    %82 = vrot.lane.b32.xlu0 %v77, 32
    %v83 = vpop.permute.xlu0 %82
    %vm86 = vcmask 392448
    %87 = vst.msk [vmem:[#allocation2 + $0x1] sm:$0xff] %vm86, %v81
    %88 = vst.msk [vmem:[#allocation2 + $0x9] sm:$0xff] %vm86, %v83
    %s89 = scalar_lea.vmem [#allocation3], 48
    %v90 = vld [vmem:[%s89] sm:$0xff]
    %v91 = vld [vmem:[%s89 + $0x8] sm:$0xff]
    %94 = vrot.lane.b32.xlu0 %v90, 48
    %v95 = vpop.permute.xlu0 %94
    %96 = vrot.lane.b32.xlu0 %v91, 48
    %v97 = vpop.permute.xlu0 %96
    %vm100 = vcmask 523648
    %101 = vst.msk [vmem:[#allocation2 + $0x1] sm:$0xff] %vm100, %v95
    %102 = vst.msk [vmem:[#allocation2 + $0x9] sm:$0xff] %vm100, %v97
    %s103 = scalar_lea.vmem [#allocation2], 24
    %104 = vst.msk [vmem:[%s103] sm:$0x1] %vm53, 0.0
    %105 = vst.msk [vmem:[%s103 + $0x11] sm:$0x1] %vm53, 0.0
    %s106 = scalar_lea.vmem [#allocation3], 64
    %v107 = vld [vmem:[%s106] sm:$0xff]
    %v108 = vld [vmem:[%s106 + $0x8] sm:$0xff]
    %109 = vst.msk [vmem:[%s103 + $0x1] sm:$0xff] %vm58, %v107
    %110 = vst.msk [vmem:[%s103 + $0x9] sm:$0xff] %vm58, %v108
    %s111 = scalar_lea.vmem [#allocation3], 80
    %v112 = vld [vmem:[%s111] sm:$0xff]
    %v113 = vld [vmem:[%s111 + $0x8] sm:$0xff]
    %116 = vrot.lane.b32.xlu0 %v112, 16
    %v117 = vpop.permute.xlu0 %116
    %118 = vrot.lane.b32.xlu0 %v113, 16
    %v119 = vpop.permute.xlu0 %118
    %122 = vst.msk [vmem:[%s103 + $0x1] sm:$0xff] %vm72, %v117
    %123 = vst.msk [vmem:[%s103 + $0x9] sm:$0xff] %vm72, %v119
    %s124 = scalar_lea.vmem [#allocation3], 96
    %v125 = vld [vmem:[%s124] sm:$0xff]
    %v126 = vld [vmem:[%s124 + $0x8] sm:$0xff]
    %129 = vrot.lane.b32.xlu0 %v125, 32
    %v130 = vpop.permute.xlu0 %129
    %131 = vrot.lane.b32.xlu0 %v126, 32
    %v132 = vpop.permute.xlu0 %131
    %135 = vst.msk [vmem:[%s103 + $0x1] sm:$0xff] %vm86, %v130
    %136 = vst.msk [vmem:[%s103 + $0x9] sm:$0xff] %vm86, %v132
    %s137 = scalar_lea.vmem [#allocation3], 112
    %v138 = vld [vmem:[%s137] sm:$0xff]
    %v139 = vld [vmem:[%s137 + $0x8] sm:$0xff]
    %142 = vrot.lane.b32.xlu0 %v138, 48
    %v143 = vpop.permute.xlu0 %142
    %144 = vrot.lane.b32.xlu0 %v139, 48
    %v145 = vpop.permute.xlu0 %144
    %148 = vst.msk [vmem:[%s103 + $0x1] sm:$0xff] %vm100, %v143
    %149 = vst.msk [vmem:[%s103 + $0x9] sm:$0xff] %vm100, %v145
    %v150 = vld [vmem:[#allocation2 + $0x1] sm:$0xff]
    %v151 = vld [vmem:[#allocation2 + $0x9] sm:$0xff]
    %v152 = vld [vmem:[%s103 + $0x1] sm:$0xff]
    %v153 = vld [vmem:[%s103 + $0x9] sm:$0xff]
    %s154 = scalar_lea.vmem [#allocation6], 64
    %v155 = vld [vmem:[%s154] sm:$0xff]
    %v156 = vld [vmem:[%s154 + $0x8] sm:$0xff]
    %v157 = vld [vmem:[%s154 + $0x10] sm:$0xff]
    %v158 = vld [vmem:[%s154 + $0x18] sm:$0xff]
    %v159 = vld [vmem:[%s154 + $0x20] sm:$0xff]
    %v160 = vld [vmem:[%s154 + $0x28] sm:$0xff]
    %v161 = vld [vmem:[%s154 + $0x30] sm:$0xff]
    %v162 = vld [vmem:[%s154 + $0x38] sm:$0xff]
    %v163 = vld [vmem:[#allocation2] sm:$0xff]
    %v164 = vld [vmem:[#allocation2 + $0x8] sm:$0xff]
    %v165 = vld [vmem:[%s103] sm:$0xff]
    %v166 = vld [vmem:[%s103 + $0x8] sm:$0xff]
    %v167 = vld [vmem:[#allocation6] sm:$0xff]
    %v168 = vld [vmem:[#allocation6 + $0x8] sm:$0xff]
    %v169 = vld [vmem:[#allocation6 + $0x10] sm:$0xff]
    %v170 = vld [vmem:[#allocation6 + $0x18] sm:$0xff]
    %v171 = vld [vmem:[#allocation6 + $0x20] sm:$0xff]
    %v172 = vld [vmem:[#allocation6 + $0x28] sm:$0xff]
    %v173 = vld [vmem:[#allocation6 + $0x30] sm:$0xff]
    %v174 = vld [vmem:[#allocation6 + $0x38] sm:$0xff]
    %vm175 = vcmask 523264
    %v177 = vsel %vm175, %v163, 0
    %v180 = vsel %vm175, %v164, 0
    %v183 = vsel %vm175, %v165, 0
    %v186 = vsel %vm175, %v166, 0
    %188 = vmatpush.msra.mxu0 0.0
    %189 = vmatpush.msra.mxu0 0.0
    %190 = vmatpush.msra.mxu0 0.0
    %191 = vmatpush.msra.mxu0 0.0
    %192 = vmatpush.msra.mxu0 0.0
    %193 = vmatpush.msra.mxu0 0.0
    %194 = vmatpush.msra.mxu0 0.0
    %195 = vmatpush.msra.mxu0 0.0
    %196 = vmatpush.msra.mxu0 %v174
    %197 = vmatpush.msra.mxu0 %v173
    %198 = vmatpush.msra.mxu0 %v172
    %199 = vmatpush.msra.mxu0 %v171
    %200 = vmatpush.msra.mxu0 %v170
    %201 = vmatpush.msra.mxu0 %v169
    %202 = vmatpush.msra.mxu0 %v168
    %203 = vmatpush.msra.mxu0 %v167
    %204 = vmatmul.f32.gmra.mxu0 %v177
    %v205 = vpop.f32.mrf.mxu0
    %v206 = vadd.f32 0.0, %v205
    %207 = vmatmul.f32.gmra.mxu0 %v180
    %v208 = vpop.f32.mrf.mxu0
    %v209 = vadd.f32 0.0, %v208
    %210 = vmatmul.f32.gmra.mxu0 %v183
    %v211 = vpop.f32.mrf.mxu0
    %v212 = vadd.f32 0.0, %v211
    %213 = vmatmul.f32.gmra.mxu0 %v186
    %v214 = vpop.f32.mrf.mxu0
    %v215 = vadd.f32 0.0, %v214
    %216 = vdwg.mxu0
    %v218 = vsel %vm175, %v150, 0
    %v221 = vsel %vm175, %v151, 0
    %v224 = vsel %vm175, %v152, 0
    %v227 = vsel %vm175, %v153, 0
    %229 = vmatpush.msra.mxu0 0.0
    %230 = vmatpush.msra.mxu0 0.0
    %231 = vmatpush.msra.mxu0 0.0
    %232 = vmatpush.msra.mxu0 0.0
    %233 = vmatpush.msra.mxu0 0.0
    %234 = vmatpush.msra.mxu0 0.0
    %235 = vmatpush.msra.mxu0 0.0
    %236 = vmatpush.msra.mxu0 0.0
    %237 = vmatpush.msra.mxu0 %v162
    %238 = vmatpush.msra.mxu0 %v161
    %239 = vmatpush.msra.mxu0 %v160
    %240 = vmatpush.msra.mxu0 %v159
    %241 = vmatpush.msra.mxu0 %v158
    %242 = vmatpush.msra.mxu0 %v157
    %243 = vmatpush.msra.mxu0 %v156
    %244 = vmatpush.msra.mxu0 %v155
    %245 = vmatmul.f32.gmra.mxu0 %v218
    %v246 = vpop.f32.mrf.mxu0
    %v247 = vadd.f32 %v206, %v246
    %248 = vmatmul.f32.gmra.mxu0 %v221
    %v249 = vpop.f32.mrf.mxu0
    %v250 = vadd.f32 %v209, %v249
    %251 = vmatmul.f32.gmra.mxu0 %v224
    %v252 = vpop.f32.mrf.mxu0
    %v253 = vadd.f32 %v212, %v252
    %254 = vmatmul.f32.gmra.mxu0 %v227
    %v255 = vpop.f32.mrf.mxu0
    %v256 = vadd.f32 %v215, %v255
    %257 = vdwg.mxu0
    %v258 = vld [vmem:[#allocation2 + $0x2] sm:$0xff]
    %v259 = vld [vmem:[#allocation2 + $0xa] sm:$0xff]
    %v260 = vld [vmem:[%s103 + $0x2] sm:$0xff]
    %v261 = vld [vmem:[%s103 + $0xa] sm:$0xff]
    %s262 = scalar_lea.vmem [#allocation6], 128
    %v263 = vld [vmem:[%s262] sm:$0xff]
    %v264 = vld [vmem:[%s262 + $0x8] sm:$0xff]
    %v265 = vld [vmem:[%s262 + $0x10] sm:$0xff]
    %v266 = vld [vmem:[%s262 + $0x18] sm:$0xff]
    %v267 = vld [vmem:[%s262 + $0x20] sm:$0xff]
    %v268 = vld [vmem:[%s262 + $0x28] sm:$0xff]
    %v269 = vld [vmem:[%s262 + $0x30] sm:$0xff]
    %v270 = vld [vmem:[%s262 + $0x38] sm:$0xff]
    %v272 = vsel %vm175, %v258, 0
    %v275 = vsel %vm175, %v259, 0
    %v278 = vsel %vm175, %v260, 0
    %v281 = vsel %vm175, %v261, 0
    %283 = vmatpush.msra.mxu0 0.0
    %284 = vmatpush.msra.mxu0 0.0
    %285 = vmatpush.msra.mxu0 0.0
    %286 = vmatpush.msra.mxu0 0.0
    %287 = vmatpush.msra.mxu0 0.0
    %288 = vmatpush.msra.mxu0 0.0
    %289 = vmatpush.msra.mxu0 0.0
    %290 = vmatpush.msra.mxu0 0.0
    %291 = vmatpush.msra.mxu0 %v270
    %292 = vmatpush.msra.mxu0 %v269
    %293 = vmatpush.msra.mxu0 %v268
    %294 = vmatpush.msra.mxu0 %v267
    %295 = vmatpush.msra.mxu0 %v266
    %296 = vmatpush.msra.mxu0 %v265
    %297 = vmatpush.msra.mxu0 %v264
    %298 = vmatpush.msra.mxu0 %v263
    %299 = vmatmul.f32.gmra.mxu0 %v272
    %v300 = vpop.f32.mrf.mxu0
    %v301 = vadd.f32 0.0, %v300
    %302 = vmatmul.f32.gmra.mxu0 %v275
    %v303 = vpop.f32.mrf.mxu0
    %v304 = vadd.f32 0.0, %v303
    %305 = vmatmul.f32.gmra.mxu0 %v278
    %v306 = vpop.f32.mrf.mxu0
    %v307 = vadd.f32 0.0, %v306
    %308 = vmatmul.f32.gmra.mxu0 %v281
    %v309 = vpop.f32.mrf.mxu0
    %v310 = vadd.f32 0.0, %v309
    %311 = vdwg.mxu0
    %v312 = vadd.f32 %v247, %v301
    %v313 = vadd.f32 %v250, %v304
    %v314 = vadd.f32 %v253, %v307
    %v315 = vadd.f32 %v256, %v310
    %v316 = vlaneseq
    %v317 = vshrl.u32 %v316, 7
    %v318 = vadd.s32 %v317, 8
    %v319 = vadd.s32 %v317, 16
    %v320 = vadd.s32 %v317, 24
    %v321 = vadd.s32 %v317, 32
    %v322 = vadd.s32 %v317, 40
    %v323 = vadd.s32 %v317, 48
    %v324 = vadd.s32 %v317, 56
    %v325 = vadd.s32 %v317, 64
    %v326 = vadd.s32 %v317, 72
    %v327 = vadd.s32 %v317, 80
    %v328 = vadd.s32 %v317, 88
    %v329 = vadd.s32 %v317, 96
    %v330 = vadd.s32 %v317, 104
    %v331 = vadd.s32 %v317, 112
    %v332 = vadd.s32 %v317, 120
    %vm333 = vcmp.lt.s32.totalorder %v317, 0
    %v334 = vsub.s32 0, %v317
    %v335 = vsel %vm333, %v334, %v317
    %v336 = vshrl.u32 %v335, 3
    %v337 = vand.u32 %v335, 7
    %v338 = vsub.s32 0, %v337
    %v339 = vsel %vm333, %v338, %v337
    %vm340 = vcmp.lt.s32.totalorder %v318, 0
    %v341 = vsub.s32 0, %v318
    %v342 = vsel %vm340, %v341, %v318
    %v343 = vshrl.u32 %v342, 3
    %v344 = vand.u32 %v342, 7
    %v345 = vsub.s32 0, %v344
    %v346 = vsel %vm340, %v345, %v344
    %vm347 = vcmp.lt.s32.totalorder %v319, 0
    %v348 = vsub.s32 0, %v319
    %v349 = vsel %vm347, %v348, %v319
    %v350 = vshrl.u32 %v349, 3
    %v351 = vand.u32 %v349, 7
    %v352 = vsub.s32 0, %v351
    %v353 = vsel %vm347, %v352, %v351
    %vm354 = vcmp.lt.s32.totalorder %v320, 0
    %v355 = vsub.s32 0, %v320
    %v356 = vsel %vm354, %v355, %v320
    %v357 = vshrl.u32 %v356, 3
    %v358 = vand.u32 %v356, 7
    %v359 = vsub.s32 0, %v358
    %v360 = vsel %vm354, %v359, %v358
    %vm361 = vcmp.lt.s32.totalorder %v321, 0
    %v362 = vsub.s32 0, %v321
    %v363 = vsel %vm361, %v362, %v321
    %v364 = vshrl.u32 %v363, 3
    %v365 = vand.u32 %v363, 7
    %v366 = vsub.s32 0, %v365
    %v367 = vsel %vm361, %v366, %v365
    %vm368 = vcmp.lt.s32.totalorder %v322, 0
    %v369 = vsub.s32 0, %v322
    %v370 = vsel %vm368, %v369, %v322
    %v371 = vshrl.u32 %v370, 3
    %v372 = vand.u32 %v370, 7
    %v373 = vsub.s32 0, %v372
    %v374 = vsel %vm368, %v373, %v372
    %vm375 = vcmp.lt.s32.totalorder %v323, 0
    %v376 = vsub.s32 0, %v323
    %v377 = vsel %vm375, %v376, %v323
    %v378 = vshrl.u32 %v377, 3
    %v379 = vand.u32 %v377, 7
    %v380 = vsub.s32 0, %v379
    %v381 = vsel %vm375, %v380, %v379
    %vm382 = vcmp.lt.s32.totalorder %v324, 0
    %v383 = vsub.s32 0, %v324
    %v384 = vsel %vm382, %v383, %v324
    %v385 = vshrl.u32 %v384, 3
    %v386 = vand.u32 %v384, 7
    %v387 = vsub.s32 0, %v386
    %v388 = vsel %vm382, %v387, %v386
    %vm389 = vcmp.lt.s32.totalorder %v325, 0
    %v390 = vsub.s32 0, %v325
    %v391 = vsel %vm389, %v390, %v325
    %v392 = vshrl.u32 %v391, 3
    %v393 = vand.u32 %v391, 7
    %v394 = vsub.s32 0, %v393
    %v395 = vsel %vm389, %v394, %v393
    %vm396 = vcmp.lt.s32.totalorder %v326, 0
    %v397 = vsub.s32 0, %v326
    %v398 = vsel %vm396, %v397, %v326
    %v399 = vshrl.u32 %v398, 3
    %v400 = vand.u32 %v398, 7
    %v401 = vsub.s32 0, %v400
    %v402 = vsel %vm396, %v401, %v400
    %vm403 = vcmp.lt.s32.totalorder %v327, 0
    %v404 = vsub.s32 0, %v327
    %v405 = vsel %vm403, %v404, %v327
    %v406 = vshrl.u32 %v405, 3
    %v407 = vand.u32 %v405, 7
    %v408 = vsub.s32 0, %v407
    %v409 = vsel %vm403, %v408, %v407
    %vm410 = vcmp.lt.s32.totalorder %v328, 0
    %v411 = vsub.s32 0, %v328
    %v412 = vsel %vm410, %v411, %v328
    %v413 = vshrl.u32 %v412, 3
    %v414 = vand.u32 %v412, 7
    %v415 = vsub.s32 0, %v414
    %v416 = vsel %vm410, %v415, %v414
    %vm417 = vcmp.lt.s32.totalorder %v329, 0
    %v418 = vsub.s32 0, %v329
    %v419 = vsel %vm417, %v418, %v329
    %v420 = vshrl.u32 %v419, 3
    %v421 = vand.u32 %v419, 7
    %v422 = vsub.s32 0, %v421
    %v423 = vsel %vm417, %v422, %v421
    %vm424 = vcmp.lt.s32.totalorder %v330, 0
    %v425 = vsub.s32 0, %v330
    %v426 = vsel %vm424, %v425, %v330
    %v427 = vshrl.u32 %v426, 3
    %v428 = vand.u32 %v426, 7
    %v429 = vsub.s32 0, %v428
    %v430 = vsel %vm424, %v429, %v428
    %vm431 = vcmp.lt.s32.totalorder %v331, 0
    %v432 = vsub.s32 0, %v331
    %v433 = vsel %vm431, %v432, %v331
    %v434 = vshrl.u32 %v433, 3
    %v435 = vand.u32 %v433, 7
    %v436 = vsub.s32 0, %v435
    %v437 = vsel %vm431, %v436, %v435
    %vm438 = vcmp.lt.s32.totalorder %v332, 0
    %v439 = vsub.s32 0, %v332
    %v440 = vsel %vm438, %v439, %v332
    %v441 = vshrl.u32 %v440, 3
    %v442 = vand.u32 %v440, 7
    %v443 = vsub.s32 0, %v442
    %v444 = vsel %vm438, %v443, %v442
    %vm445 = vcmp.ne.s32.totalorder %v339, 0
    %vm446 = vcmp.ne.s32.totalorder %v346, 0
    %vm447 = vcmp.ne.s32.totalorder %v353, 0
    %vm448 = vcmp.ne.s32.totalorder %v360, 0
    %vm449 = vcmp.ne.s32.totalorder %v367, 0
    %vm450 = vcmp.ne.s32.totalorder %v374, 0
    %vm451 = vcmp.ne.s32.totalorder %v381, 0
    %vm452 = vcmp.ne.s32.totalorder %v388, 0
    %vm453 = vcmp.ne.s32.totalorder %v395, 0
    %vm454 = vcmp.ne.s32.totalorder %v402, 0
    %vm455 = vcmp.ne.s32.totalorder %v409, 0
    %vm456 = vcmp.ne.s32.totalorder %v416, 0
    %vm457 = vcmp.ne.s32.totalorder %v423, 0
    %vm458 = vcmp.ne.s32.totalorder %v430, 0
    %vm459 = vcmp.ne.s32.totalorder %v437, 0
    %vm460 = vcmp.ne.s32.totalorder %v444, 0
    %vm461 = vcmp.lt.s32.totalorder %v339, 0
    %vm462 = vcmp.lt.s32.totalorder %v346, 0
    %vm463 = vcmp.lt.s32.totalorder %v353, 0
    %vm464 = vcmp.lt.s32.totalorder %v360, 0
    %vm465 = vcmp.lt.s32.totalorder %v367, 0
    %vm466 = vcmp.lt.s32.totalorder %v374, 0
    %vm467 = vcmp.lt.s32.totalorder %v381, 0
    %vm468 = vcmp.lt.s32.totalorder %v388, 0
    %vm469 = vcmp.lt.s32.totalorder %v395, 0
    %vm470 = vcmp.lt.s32.totalorder %v402, 0
    %vm471 = vcmp.lt.s32.totalorder %v409, 0
    %vm472 = vcmp.lt.s32.totalorder %v416, 0
    %vm473 = vcmp.lt.s32.totalorder %v423, 0
    %vm474 = vcmp.lt.s32.totalorder %v430, 0
    %vm475 = vcmp.lt.s32.totalorder %v437, 0
    %vm476 = vcmp.lt.s32.totalorder %v444, 0
    %vm477 = vmand %vm461, %vm445
    %vm478 = vmand %vm462, %vm446
    %vm479 = vmand %vm463, %vm447
    %vm480 = vmand %vm464, %vm448
    %vm481 = vmand %vm465, %vm449
    %vm482 = vmand %vm466, %vm450
    %vm483 = vmand %vm467, %vm451
    %vm484 = vmand %vm468, %vm452
    %vm485 = vmand %vm469, %vm453
    %vm486 = vmand %vm470, %vm454
    %vm487 = vmand %vm471, %vm455
    %vm488 = vmand %vm472, %vm456
    %vm489 = vmand %vm473, %vm457
    %vm490 = vmand %vm474, %vm458
    %vm491 = vmand %vm475, %vm459
    %vm492 = vmand %vm476, %vm460
    %v493 = vadd.s32 %v339, 8
    %v494 = vadd.s32 %v346, 8
    %v495 = vadd.s32 %v353, 8
    %v496 = vadd.s32 %v360, 8
    %v497 = vadd.s32 %v367, 8
    %v498 = vadd.s32 %v374, 8
    %v499 = vadd.s32 %v381, 8
    %v500 = vadd.s32 %v388, 8
    %v501 = vadd.s32 %v395, 8
    %v502 = vadd.s32 %v402, 8
    %v503 = vadd.s32 %v409, 8
    %v504 = vadd.s32 %v416, 8
    %v505 = vadd.s32 %v423, 8
    %v506 = vadd.s32 %v430, 8
    %v507 = vadd.s32 %v437, 8
    %v508 = vadd.s32 %v444, 8
    %v509 = vsel %vm477, %v493, %v339
    %v510 = vsel %vm478, %v494, %v346
    %v511 = vsel %vm479, %v495, %v353
    %v512 = vsel %vm480, %v496, %v360
    %v513 = vsel %vm481, %v497, %v367
    %v514 = vsel %vm482, %v498, %v374
    %v515 = vsel %vm483, %v499, %v381
    %v516 = vsel %vm484, %v500, %v388
    %v517 = vsel %vm485, %v501, %v395
    %v518 = vsel %vm486, %v502, %v402
    %v519 = vsel %vm487, %v503, %v409
    %v520 = vsel %vm488, %v504, %v416
    %v521 = vsel %vm489, %v505, %v423
    %v522 = vsel %vm490, %v506, %v430
    %v523 = vsel %vm491, %v507, %v437
    %v524 = vsel %vm492, %v508, %v444
    %v525 = vlaneseq
    %v526 = vand.u32 %v525, 127
    %vm527 = vcmp.eq.s32.totalorder %v509, %v526
    %vm528 = vcmp.eq.s32.totalorder %v510, %v526
    %vm529 = vcmp.eq.s32.totalorder %v511, %v526
    %vm530 = vcmp.eq.s32.totalorder %v512, %v526
    %vm531 = vcmp.eq.s32.totalorder %v513, %v526
    %vm532 = vcmp.eq.s32.totalorder %v514, %v526
    %vm533 = vcmp.eq.s32.totalorder %v515, %v526
    %vm534 = vcmp.eq.s32.totalorder %v516, %v526
    %vm535 = vcmp.eq.s32.totalorder %v517, %v526
    %vm536 = vcmp.eq.s32.totalorder %v518, %v526
    %vm537 = vcmp.eq.s32.totalorder %v519, %v526
    %vm538 = vcmp.eq.s32.totalorder %v520, %v526
    %vm539 = vcmp.eq.s32.totalorder %v521, %v526
    %vm540 = vcmp.eq.s32.totalorder %v522, %v526
    %vm541 = vcmp.eq.s32.totalorder %v523, %v526
    %vm542 = vcmp.eq.s32.totalorder %v524, %v526
    %v543 = vsel %vm527, 1, 0
    %v544 = vsel %vm528, 1, 0
    %v545 = vsel %vm529, 1, 0
    %v546 = vsel %vm530, 1, 0
    %v547 = vsel %vm531, 1, 0
    %v548 = vsel %vm532, 1, 0
    %v549 = vsel %vm533, 1, 0
    %v550 = vsel %vm534, 1, 0
    %v551 = vsel %vm535, 1, 0
    %v552 = vsel %vm536, 1, 0
    %v553 = vsel %vm537, 1, 0
    %v554 = vsel %vm538, 1, 0
    %v555 = vsel %vm539, 1, 0
    %v556 = vsel %vm540, 1, 0
    %v557 = vsel %vm541, 1, 0
    %v558 = vsel %vm542, 1, 0
    %v559 = vcvt.s32.f32 %v543
    %v560 = vcvt.s32.f32 %v544
    %v561 = vcvt.s32.f32 %v545
    %v562 = vcvt.s32.f32 %v546
    %v563 = vcvt.s32.f32 %v547
    %v564 = vcvt.s32.f32 %v548
    %v565 = vcvt.s32.f32 %v549
    %v566 = vcvt.s32.f32 %v550
    %v567 = vcvt.s32.f32 %v551
    %v568 = vcvt.s32.f32 %v552
    %v569 = vcvt.s32.f32 %v553
    %v570 = vcvt.s32.f32 %v554
    %v571 = vcvt.s32.f32 %v555
    %v572 = vcvt.s32.f32 %v556
    %v573 = vcvt.s32.f32 %v557
    %v574 = vcvt.s32.f32 %v558
    %vm575 = vcmp.lt.s32.totalorder %v526, 0
    %v576 = vsub.s32 0, %v526
    %v577 = vsel %vm575, %v576, %v526
    %v578 = vshrl.u32 %v577, 3
    %v579 = vand.u32 %v577, 7
    %v580 = vsub.s32 0, %v579
    %v581 = vsel %vm575, %v580, %v579
    %vm582 = vcmp.ne.s32.totalorder %v581, 0
    %vm583 = vcmp.lt.s32.totalorder %v581, 0
    %vm584 = vmand %vm583, %vm582
    %v585 = vadd.s32 %v581, 8
    %v586 = vsel %vm584, %v585, %v581
    %vm587 = vcmp.eq.s32.totalorder %v586, %v317
    %v588 = vsel %vm587, 1, 0
    %v589 = vcvt.s32.f32 %v588
    %v590 = vld [vmem:[%s2] sm:$0x1]
    %vm591 = vcmask 64512
    %v593 = vsel %vm591, %v590, 0
    %595 = vmatpush.msra.mxu0 0.0
    %596 = vmatpush.msra.mxu0 0.0
    %597 = vmatpush.msra.mxu0 0.0
    %598 = vmatpush.msra.mxu0 0.0
    %599 = vmatpush.msra.mxu0 0.0
    %600 = vmatpush.msra.mxu0 0.0
    %601 = vmatpush.msra.mxu0 0.0
    %602 = vmatpush.msra.mxu0 0.0
    %603 = vmatpush.msra.mxu0 0.0
    %604 = vmatpush.msra.mxu0 0.0
    %605 = vmatpush.msra.mxu0 0.0
    %606 = vmatpush.msra.mxu0 0.0
    %607 = vmatpush.msra.mxu0 0.0
    %608 = vmatpush.msra.mxu0 0.0
    %609 = vmatpush.msra.mxu0 0.0
    %610 = vmatpush.msra.mxu0 %v589
    %611 = vmatmul.f32.gmra.mxu0 %v593
    %v612 = vpop.f32.mrf.mxu0
    %v613 = vadd.f32 0.0, %v612
    %614 = vdwg.mxu0
    %v615 = vperm.slane %v613, 0
    %v616 = vadd.f32 %v312, %v615
    %v617 = vadd.f32 %v313, %v615
    %v618 = vadd.f32 %v314, %v615
    %v619 = vadd.f32 %v315, %v615
    %v620 = vadd.f32 %v616, %v617
    %v621 = vadd.f32 %v620, %v618
    %v622 = vadd.f32 %v621, %v619
    %v623 = vrot.slane %v622, 4
    %v624 = vadd.f32 %v622, %v623
    %v625 = vrot.slane %v624, 2
    %v626 = vadd.f32 %v624, %v625
    %v627 = vrot.slane %v626, 1
    %v628 = vadd.f32 %v626, %v627
    %629 = vmatpush.msra.mxu0 %v574
    %630 = vmatpush.msra.mxu0 %v573
    %631 = vmatpush.msra.mxu0 %v572
    %632 = vmatpush.msra.mxu0 %v571
    %633 = vmatpush.msra.mxu0 %v570
    %634 = vmatpush.msra.mxu0 %v569
    %635 = vmatpush.msra.mxu0 %v568
    %636 = vmatpush.msra.mxu0 %v567
    %637 = vmatpush.msra.mxu0 %v566
    %638 = vmatpush.msra.mxu0 %v565
    %639 = vmatpush.msra.mxu0 %v564
    %640 = vmatpush.msra.mxu0 %v563
    %641 = vmatpush.msra.mxu0 %v562
    %642 = vmatpush.msra.mxu0 %v561
    %643 = vmatpush.msra.mxu0 %v560
    %644 = vmatpush.msra.mxu0 %v559
    %645 = vmatmul.f32.gmra.mxu0 %v628
    %v646 = vpop.f32.mrf.mxu0
    %v647 = vadd.f32 0.0, %v646
    %648 = vdwg.mxu0
    %v649 = vmul.f32 %v647, 0.001953125
    %v651 = vsel %vm591, %v649, 0
    %653 = vmatpush.msra.mxu0 0.0
    %654 = vmatpush.msra.mxu0 0.0
    %655 = vmatpush.msra.mxu0 0.0
    %656 = vmatpush.msra.mxu0 0.0
    %657 = vmatpush.msra.mxu0 0.0
    %658 = vmatpush.msra.mxu0 0.0
    %659 = vmatpush.msra.mxu0 0.0
    %660 = vmatpush.msra.mxu0 0.0
    %661 = vmatpush.msra.mxu0 0.0
    %662 = vmatpush.msra.mxu0 0.0
    %663 = vmatpush.msra.mxu0 0.0
    %664 = vmatpush.msra.mxu0 0.0
    %665 = vmatpush.msra.mxu0 0.0
    %666 = vmatpush.msra.mxu0 0.0
    %667 = vmatpush.msra.mxu0 0.0
    %668 = vmatpush.msra.mxu0 %v589
    %669 = vmatmul.f32.gmra.mxu0 %v651
    %v670 = vpop.f32.mrf.mxu0
    %v671 = vadd.f32 0.0, %v670
    %672 = vdwg.mxu0
    %v673 = vperm.slane %v671, 0
    %v674 = vsub.f32 %v616, %v673
    %v675 = vsub.f32 %v617, %v673
    %v676 = vsub.f32 %v618, %v673
    %v677 = vsub.f32 %v619, %v673
    %v678 = vmul.f32 %v674, %v674
    %v679 = vmul.f32 %v675, %v675
    %v680 = vmul.f32 %v676, %v676
    %v681 = vmul.f32 %v677, %v677
    %v682 = vadd.f32 %v678, %v679
    %v683 = vadd.f32 %v682, %v680
    %v684 = vadd.f32 %v683, %v681
    %v685 = vrot.slane %v684, 4
    %v686 = vadd.f32 %v684, %v685
    %v687 = vrot.slane %v686, 2
    %v688 = vadd.f32 %v686, %v687
    %v689 = vrot.slane %v688, 1
    %v690 = vadd.f32 %v688, %v689
    %691 = vmatpush.msra.mxu0 %v574
    %692 = vmatpush.msra.mxu0 %v573
    %693 = vmatpush.msra.mxu0 %v572
    %694 = vmatpush.msra.mxu0 %v571
    %695 = vmatpush.msra.mxu0 %v570
    %696 = vmatpush.msra.mxu0 %v569
    %697 = vmatpush.msra.mxu0 %v568
    %698 = vmatpush.msra.mxu0 %v567
    %699 = vmatpush.msra.mxu0 %v566
    %700 = vmatpush.msra.mxu0 %v565
    %701 = vmatpush.msra.mxu0 %v564
    %702 = vmatpush.msra.mxu0 %v563
    %703 = vmatpush.msra.mxu0 %v562
    %704 = vmatpush.msra.mxu0 %v561
    %705 = vmatpush.msra.mxu0 %v560
    %706 = vmatpush.msra.mxu0 %v559
    %707 = vmatmul.f32.gmra.mxu0 %v690
    %v708 = vpop.f32.mrf.mxu0
    %v709 = vadd.f32 0.0, %v708
    %710 = vdwg.mxu0
    %v711 = vmul.f32 %v709, 0.001953125
    %v712 = vld [vmem:[%s3] sm:$0x1]
    %v713 = vadd.f32 %v711, 1e-05
    %v714 = vrsqrt.pop %v713
    %v715 = vmul.f32 %v714, %v713
    %v716 = vmul.f32 %v715, %v714
    %v717 = vmul.f32 0.5, %v716
    %v718 = vsub.f32 1.5, %v717
    %v719 = vmul.f32 %v714, %v718
    %vm720 = vweird.f32 %v713
    %vm721 = vweird.f32 %v714
    %vm722 = vmor %vm720, %vm721
    %v723 = vsel %vm722, %v714, %v719
    %v724 = vmul.f32 %v712, %v723
    %v726 = vsel %vm591, %v724, 0
    %728 = vmatpush.msra.mxu0 0.0
    %729 = vmatpush.msra.mxu0 0.0
    %730 = vmatpush.msra.mxu0 0.0
    %731 = vmatpush.msra.mxu0 0.0
    %732 = vmatpush.msra.mxu0 0.0
    %733 = vmatpush.msra.mxu0 0.0
    %734 = vmatpush.msra.mxu0 0.0
    %735 = vmatpush.msra.mxu0 0.0
    %736 = vmatpush.msra.mxu0 0.0
    %737 = vmatpush.msra.mxu0 0.0
    %738 = vmatpush.msra.mxu0 0.0
    %739 = vmatpush.msra.mxu0 0.0
    %740 = vmatpush.msra.mxu0 0.0
    %741 = vmatpush.msra.mxu0 0.0
    %742 = vmatpush.msra.mxu0 0.0
    %743 = vmatpush.msra.mxu0 %v589
    %744 = vmatmul.f32.gmra.mxu0 %v726
    %v745 = vpop.f32.mrf.mxu0
    %v746 = vadd.f32 0.0, %v745
    %747 = vdwg.mxu0
    %v748 = vld [vmem:[%s4] sm:$0x1]
    %v750 = vsel %vm591, %v748, 0
    %752 = vmatpush.msra.mxu0 0.0
    %753 = vmatpush.msra.mxu0 0.0
    %754 = vmatpush.msra.mxu0 0.0
    %755 = vmatpush.msra.mxu0 0.0
    %756 = vmatpush.msra.mxu0 0.0
    %757 = vmatpush.msra.mxu0 0.0
    %758 = vmatpush.msra.mxu0 0.0
    %759 = vmatpush.msra.mxu0 0.0
    %760 = vmatpush.msra.mxu0 0.0
    %761 = vmatpush.msra.mxu0 0.0
    %762 = vmatpush.msra.mxu0 0.0
    %763 = vmatpush.msra.mxu0 0.0
    %764 = vmatpush.msra.mxu0 0.0
    %765 = vmatpush.msra.mxu0 0.0
    %766 = vmatpush.msra.mxu0 0.0
    %767 = vmatpush.msra.mxu0 %v589
    %768 = vmatmul.f32.gmra.mxu0 %v750
    %v769 = vpop.f32.mrf.mxu0
    %v770 = vadd.f32 0.0, %v769
    %771 = vdwg.mxu0
    %v772 = vperm.slane %v746, 0
    %v773 = vmul.f32 %v674, %v772
    %v774 = vmul.f32 %v675, %v772
    %v775 = vmul.f32 %v676, %v772
    %v776 = vmul.f32 %v677, %v772
    %v777 = vperm.slane %v770, 0
    %v778 = vadd.f32 %v773, %v777
    %v779 = vadd.f32 %v774, %v777
    %v780 = vadd.f32 %v775, %v777
    %v781 = vadd.f32 %v776, %v777
    %v782 = vmax.f32 %v778, 0.0
    %v783 = vmax.f32 %v779, 0.0
    %v784 = vmax.f32 %v780, 0.0
    %v785 = vmax.f32 %v781, 0.0
    %786 = vst [vmem:[#allocation8] sm:$0xff] %v782
    %787 = vst [vmem:[#allocation8 + $0x8] sm:$0xff] %v783
    %788 = vst [vmem:[#allocation8 + $0x10] sm:$0xff] %v784
    %789 = vst [vmem:[#allocation8 + $0x18] sm:$0xff] %v785
    // Predicated region
    $region30: #{tpu_custom_call.1} parent=1 // pred_check
      _
    $region31: #{tpu_custom_call.1} parent=1 // pred_check_branch
      %791 = sbr.rel (0) target = $region33
    $region32: #{tpu_custom_call.1} parent=1 // pred_region
      %793 = vsyncadd [#allocation5], 0
      %s794 = sshll.u32 [#allocation8], 4
      %s795 = int_to_ptr.vmem [resolvable:$true] %s794
      %s796 = sshll.u32 %s5, 4
      %s797 = int_to_ptr.hbm [resolvable:$true] %s796
      %802 = dma.vmem_to_hbm [thread:$0]  %s795, 512, %s797, [#allocation5], 128, 128, 8
    $region33: #{tpu_custom_call.1} parent=1 // pred_fallthru
      _
    // Predicated region
    $region34: #{tpu_custom_call.1} parent=1 // pred_check
      _
    $region35: #{tpu_custom_call.1} parent=1 // pred_check_branch
      %804 = sbr.rel (0) target = $region37
    $region36: #{tpu_custom_call.1} parent=1 // pred_region
      %806 = dma.done [#allocation5], 512
    $region37: #{tpu_custom_call.1} parent=1 // pred_fallthru
      _
    %807 = vsyncpa [#allocation4], 1
    %808 = vsyncpa [#allocation7], 1
    %809 = vsyncpa [#allocation5], 1

</llo_original>
